<compile_context>
chip_gen: v7x
topology: tpu7x:2x2x1
jax: 0.10.0
libtpu: 0.0.40
codegen_flags: <defaults>
</compile_context>

<pallas_src>
import functools

import numpy as np
import jax
import jax.numpy as jnp
from jax import lax
from jax.experimental import pallas as pl
from jax.experimental.pallas import tpu as pltpu

MAX_BLOCK_B = 1024   # rows per grid step cap (keeps lane-padded VMEM tiles small)


def _round_up(x, m):
    return ((x + m - 1) // m) * m


def _swish(x, beta=1.0):
    # swish(x) = x * sigmoid(beta * x)   (matches the PyTorch reference)
    return x * jax.nn.sigmoid(beta * x)


def behavior_kernel(pa_ref, st_ref, dr_ref, dh_ref,
                    emb_ref, ws_ref, wdr_ref, wdh_ref, bin_ref,
                    w1_ref, b1_ref, w2_ref, b2_ref,
                    w3t_ref, b3t_ref, out_ref):
    """Fused Behavior forward for one batch block.

    Builds one-hot(prev_action) in-kernel, fuses the four input projections,
    runs the 2-layer swish MLP, and writes the head transposed (actions on
    sublanes, batch on lanes) for lane-dense, contiguous stores.
    """
    block_b = pa_ref.shape[0]
    ne_pad = emb_ref.shape[0]

    pa = pa_ref[...]                                                  # (block_b, 1) int32
    onehot = (lax.broadcasted_iota(jnp.int32, (block_b, ne_pad), 1)
              == pa).astype(jnp.float32)                              # (block_b, ne_pad)

    # Fused input projection.  dr/dh have a single input feature, so their
    # Linear layers are plain outer products (VPU broadcast-multiply); the
    # return/horizon scales and the three biases were folded in at prep time.
    h = (jnp.dot(onehot, emb_ref[...], preferred_element_type=jnp.float32)
         + jnp.dot(st_ref[...], ws_ref[...], preferred_element_type=jnp.float32)
         + dr_ref[...] * wdr_ref[...]
         + dh_ref[...] * wdh_ref[...]
         + bin_ref[...])

    h = _swish(jnp.dot(h, w1_ref[...], preferred_element_type=jnp.float32) + b1_ref[...])
    h = _swish(jnp.dot(h, w2_ref[...], preferred_element_type=jnp.float32) + b2_ref[...])

    # Transposed head: out[a, b] = sum_k w3t[a, k] * h[b, k]  (q @ k^T pattern)
    out_t = lax.dot_general(w3t_ref[...], h,
                            dimension_numbers=(((1,), (1,)), ((), ())),
                            preferred_element_type=jnp.float32)       # (act_pad, block_b)
    out_ref[...] = out_t + b3t_ref[...]


def init_behavior_params(key, hidden_size, state_shape, num_actions):
    """Deterministic synthetic parameters (PyTorch-Linear-shaped, pre-transposed to [in,out])."""
    total_state = int(np.prod(state_shape))
    keys = jax.random.split(key, 13)

    def lin(kw, kb, fan_in, fan_out):
        bound = 1.0 / np.sqrt(fan_in)
        w = jax.random.uniform(kw, (fan_in, fan_out), jnp.float32, -bound, bound)
        b = jax.random.uniform(kb, (1, fan_out), jnp.float32, -bound, bound)
        return w, b

    params = {}
    params["emb"] = jax.random.normal(keys[0], (num_actions + 1, hidden_size), jnp.float32)
    params["ws"], params["bs"] = lin(keys[1], keys[2], total_state, hidden_size)
    params["wdr"], params["bdr"] = lin(keys[3], keys[4], 1, hidden_size)
    params["wdh"], params["bdh"] = lin(keys[5], keys[6], 1, hidden_size)
    params["w1"], params["b1"] = lin(keys[7], keys[8], hidden_size, hidden_size)
    params["w2"], params["b2"] = lin(keys[9], keys[10], hidden_size, hidden_size)
    params["w3"], params["b3"] = lin(keys[11], keys[12], hidden_size, num_actions)
    return params


def prepare_params(params, return_scale, horizon_scale, num_actions):
    """One-time host-side prep: pad emb rows to 8, fold scales into wdr/wdh,
    pre-sum the three input biases, pre-transpose + zero-pad the fc3 head."""
    hidden = params["w1"].shape[0]
    num_emb = num_actions + 1
    ne_pad = _round_up(num_emb, 8)
    act_pad = _round_up(num_actions, 8)

    emb_p = jnp.zeros((ne_pad, hidden), jnp.float32).at[:num_emb].set(
        params["emb"].astype(jnp.float32))
    w3t = jnp.zeros((act_pad, hidden), jnp.float32).at[:num_actions].set(
        params["w3"].astype(jnp.float32).T)
    b3t = jnp.zeros((act_pad, 1), jnp.float32).at[:num_actions, 0].set(
        params["b3"].astype(jnp.float32)[0])

    return {
        "emb": emb_p,                                                       # (ne_pad, H)
        "ws": params["ws"].astype(jnp.float32),                             # (S, H)
        "wdr": (params["wdr"] * float(return_scale)).astype(jnp.float32),   # (1, H)
        "wdh": (params["wdh"] * float(horizon_scale)).astype(jnp.float32),  # (1, H)
        "b_in": (params["bs"] + params["bdr"] + params["bdh"]).astype(jnp.float32),
        "w1": params["w1"].astype(jnp.float32), "b1": params["b1"].astype(jnp.float32),
        "w2": params["w2"].astype(jnp.float32), "b2": params["b2"].astype(jnp.float32),
        "w3t": w3t,                                                         # (act_pad, H)
        "b3t": b3t,                                                         # (act_pad, 1)
    }


@functools.partial(jax.jit, static_argnames=("num_actions",))
def behavior_forward(prep, prev_action, state, dr, dh, *, num_actions):
    B = state.shape[0]
    hidden = prep["w1"].shape[0]
    total_state = int(np.prod(state.shape[1:]))
    ne_pad = prep["emb"].shape[0]
    act_pad = prep["w3t"].shape[0]

    pa = prev_action.reshape(B, 1).astype(jnp.int32)
    st = state.reshape(B, total_state).astype(jnp.float32)
    drc = dr.reshape(B, 1).astype(jnp.float32)
    dhc = dh.reshape(B, 1).astype(jnp.float32)

    # Batch tiling: one big block for B <= MAX_BLOCK_B (grid overhead gone);
    # otherwise >= 2 "parallel" blocks so v7x's two TensorCores both get work.
    # Blocks keep the sublane axis a multiple of 8 (and 128-aligned lanes for
    # the transposed output when gridded).
    if B <= MAX_BLOCK_B:
        block_b = max(8, _round_up(B, 8))
        grid_n = 1
    else:
        block_b = min(MAX_BLOCK_B, _round_up(pl.cdiv(B, 2), 128))
        grid_n = pl.cdiv(B, block_b)
    b_pad = grid_n * block_b
    if b_pad != B:
        pad = ((0, b_pad - B), (0, 0))
        pa, st, drc, dhc = (jnp.pad(a, pad) for a in (pa, st, drc, dhc))

    vmem = pltpu.MemorySpace.VMEM
    row_map = lambda i: (i, 0)   # batch-tiled inputs (batch on sublanes)
    col_map = lambda i: (0, i)   # batch-tiled output (batch on lanes)
    rep_map = lambda i: (0, 0)   # replicated weights / biases

    out_t = pl.pallas_call(
        behavior_kernel,
        out_shape=jax.ShapeDtypeStruct((act_pad, b_pad), jnp.float32),
        grid_spec=pltpu.PrefetchScalarGridSpec(
            num_scalar_prefetch=0,
            grid=(grid_n,),
            in_specs=[
                pl.BlockSpec((block_b, 1), row_map, memory_space=vmem),            # prev_action
                pl.BlockSpec((block_b, total_state), row_map, memory_space=vmem),  # state
                pl.BlockSpec((block_b, 1), row_map, memory_space=vmem),            # dr
                pl.BlockSpec((block_b, 1), row_map, memory_space=vmem),            # dh
                pl.BlockSpec((ne_pad, hidden), rep_map, memory_space=vmem),        # emb (padded)
                pl.BlockSpec((total_state, hidden), rep_map, memory_space=vmem),   # ws
                pl.BlockSpec((1, hidden), rep_map, memory_space=vmem),             # wdr * rs
                pl.BlockSpec((1, hidden), rep_map, memory_space=vmem),             # wdh * hs
                pl.BlockSpec((1, hidden), rep_map, memory_space=vmem),             # bs+bdr+bdh
                pl.BlockSpec((hidden, hidden), rep_map, memory_space=vmem),        # w1
                pl.BlockSpec((1, hidden), rep_map, memory_space=vmem),             # b1
                pl.BlockSpec((hidden, hidden), rep_map, memory_space=vmem),        # w2
                pl.BlockSpec((1, hidden), rep_map, memory_space=vmem),             # b2
                pl.BlockSpec((act_pad, hidden), rep_map, memory_space=vmem),       # w3^T (padded)
                pl.BlockSpec((act_pad, 1), rep_map, memory_space=vmem),            # b3^T (padded)
            ],
            out_specs=pl.BlockSpec((act_pad, block_b), col_map, memory_space=vmem),
        ),
        compiler_params=pltpu.CompilerParams(
            dimension_semantics=("parallel",)),
    )(pa, st, drc, dhc,
      prep["emb"], prep["ws"], prep["wdr"], prep["wdh"], prep["b_in"],
      prep["w1"], prep["b1"], prep["w2"], prep["b2"],
      prep["w3t"], prep["b3t"])

    # Real logits live in sublanes [0:num_actions]; cheap slice + transpose
    # back to (B, num_actions) inside the same jit.
    return out_t[:num_actions, :B].T


def behavior_reference(params, prev_action, state, dr, dh,
                       return_scale, horizon_scale):
    """Pure-JAX reference mirroring the PyTorch forward (sanity check)."""
    B = state.shape[0]
    s = state.reshape(B, -1).astype(jnp.float32)
    out = (params["emb"][prev_action]
           + s @ params["ws"] + params["bs"]
           + (dr * return_scale) @ params["wdr"] + params["bdr"]
           + (dh * horizon_scale) @ params["wdh"] + params["bdh"])
    out = _swish(out @ params["w1"] + params["b1"])
    out = _swish(out @ params["w2"] + params["b2"])
    return out @ params["w3"] + params["b3"]


if __name__ == "__main__":
    # CartPole-ish small config.
    hidden_size = 32
    state_shape = (4,)
    num_actions = 2
    return_scale = 0.02
    horizon_scale = 0.01

    key = jax.random.PRNGKey(0)
    kp, kdata = jax.random.split(key, 2)

    params = init_behavior_params(kp, hidden_size, state_shape, num_actions)
    prep = prepare_params(params, return_scale, horizon_scale, num_actions)

    # B=5: tiny odd batch (single block, 3 pad rows).
    # B=256: single-block aligned batch (no padding, one grid step).
    # B=2000: gridded path (2 "parallel" 1024-row blocks, 48 pad rows).
    for B in (5, 256, 2000):
        ka, ks, kr, kh = jax.random.split(jax.random.fold_in(kdata, B), 4)
        prev_action = jax.random.randint(ka, (B,), 0, num_actions + 1, jnp.int32)
        state = jax.random.normal(ks, (B,) + state_shape, jnp.float32)
        dr = jax.random.normal(kr, (B, 1), jnp.float32) * 50.0          # desired return
        dh = jax.random.uniform(kh, (B, 1), jnp.float32, 1.0, 200.0)    # desired horizon

        out = behavior_forward(prep, prev_action, state, dr, dh,
                               num_actions=num_actions)
        out = jax.block_until_ready(out)

        ref = behavior_reference(params, prev_action, state, dr, dh,
                                 return_scale, horizon_scale)
        np.testing.assert_allclose(np.asarray(out), np.asarray(ref),
                                   rtol=1e-5, atol=2e-5)
        assert out.shape == (B, num_actions)

    print("KERNEL_OK")
</pallas_src>

<mosaic_0001>
module attributes {stable_mosaic.version = 11 : i64} {
  func.func @behavior_kernel(%arg0: i32, %arg1: memref<8x1xi32, #tpu.memory_space<vmem>>, %arg2: memref<8x4xf32, #tpu.memory_space<vmem>>, %arg3: memref<8x1xf32, #tpu.memory_space<vmem>>, %arg4: memref<8x1xf32, #tpu.memory_space<vmem>>, %arg5: memref<8x32xf32, #tpu.memory_space<vmem>>, %arg6: memref<4x32xf32, #tpu.memory_space<vmem>>, %arg7: memref<1x32xf32, #tpu.memory_space<vmem>>, %arg8: memref<1x32xf32, #tpu.memory_space<vmem>>, %arg9: memref<1x32xf32, #tpu.memory_space<vmem>>, %arg10: memref<32x32xf32, #tpu.memory_space<vmem>>, %arg11: memref<1x32xf32, #tpu.memory_space<vmem>>, %arg12: memref<32x32xf32, #tpu.memory_space<vmem>>, %arg13: memref<1x32xf32, #tpu.memory_space<vmem>>, %arg14: memref<8x32xf32, #tpu.memory_space<vmem>>, %arg15: memref<8x1xf32, #tpu.memory_space<vmem>>, %arg16: memref<8x8xf32, #tpu.memory_space<vmem>>) attributes {dimension_semantics = [#tpu.dimension_semantics<parallel>], iteration_bounds = array<i64: 1>, scalar_prefetch = 0 : i64, scratch_operands = 0 : i64, tpu.core_type = #tpu.core_type<tc>, window_params = [{transform_indices = @transform_0, window_bounds = array<i64: 8, 1>}, {transform_indices = @transform_1, window_bounds = array<i64: 8, 4>}, {transform_indices = @transform_2, window_bounds = array<i64: 8, 1>}, {transform_indices = @transform_3, window_bounds = array<i64: 8, 1>}, {pipeline_mode = #tpu.pipeline_mode<synchronous>, transform_indices = @transform_4, window_bounds = array<i64: 8, 32>}, {pipeline_mode = #tpu.pipeline_mode<synchronous>, transform_indices = @transform_5, window_bounds = array<i64: 4, 32>}, {pipeline_mode = #tpu.pipeline_mode<synchronous>, transform_indices = @transform_6, window_bounds = array<i64: 1, 32>}, {pipeline_mode = #tpu.pipeline_mode<synchronous>, transform_indices = @transform_7, window_bounds = array<i64: 1, 32>}, {pipeline_mode = #tpu.pipeline_mode<synchronous>, transform_indices = @transform_8, window_bounds = array<i64: 1, 32>}, {pipeline_mode = #tpu.pipeline_mode<synchronous>, transform_indices = @transform_9, window_bounds = array<i64: 32, 32>}, {pipeline_mode = #tpu.pipeline_mode<synchronous>, transform_indices = @transform_10, window_bounds = array<i64: 1, 32>}, {pipeline_mode = #tpu.pipeline_mode<synchronous>, transform_indices = @transform_11, window_bounds = array<i64: 32, 32>}, {pipeline_mode = #tpu.pipeline_mode<synchronous>, transform_indices = @transform_12, window_bounds = array<i64: 1, 32>}, {pipeline_mode = #tpu.pipeline_mode<synchronous>, transform_indices = @transform_13, window_bounds = array<i64: 8, 32>}, {pipeline_mode = #tpu.pipeline_mode<synchronous>, transform_indices = @transform_14, window_bounds = array<i64: 8, 1>}, {transform_indices = @transform_15, window_bounds = array<i64: 8, 8>}]} {
    %c0 = arith.constant 0 : index
    %c0_0 = arith.constant 0 : index
    %0 = vector.load %arg1[%c0, %c0_0] : memref<8x1xi32, #tpu.memory_space<vmem>>, vector<8x1xi32>
    %1 = tpu.iota {dimensions = array<i32: 1>} : vector<8x8xi32>
    %2 = vector.broadcast %0 : vector<8x1xi32> to vector<8x8xi32>
    %3 = arith.cmpi eq, %1, %2 : vector<8x8xi32>
    %4 = arith.extui %3 : vector<8x8xi1> to vector<8x8xi32>
    %5 = arith.sitofp %4 : vector<8x8xi32> to vector<8x8xf32>
    %c0_1 = arith.constant 0 : index
    %c0_2 = arith.constant 0 : index
    %6 = vector.load %arg5[%c0_1, %c0_2] : memref<8x32xf32, #tpu.memory_space<vmem>>, vector<8x32xf32>
    %cst = arith.constant dense<0.000000e+00> : vector<8x32xf32>
    %7 = tpu.matmul %5, %6, %cst {dimension_numbers = #tpu.dot_dimension_numbers<[1], [0], [0], [1], [0, 0, 1, 1], [], []>} : vector<8x8xf32>, vector<8x32xf32>, vector<8x32xf32> -> vector<8x32xf32>
    %c0_3 = arith.constant 0 : index
    %c0_4 = arith.constant 0 : index
    %8 = vector.load %arg2[%c0_3, %c0_4] : memref<8x4xf32, #tpu.memory_space<vmem>>, vector<8x4xf32>
    %c0_5 = arith.constant 0 : index
    %c0_6 = arith.constant 0 : index
    %9 = vector.load %arg6[%c0_5, %c0_6] : memref<4x32xf32, #tpu.memory_space<vmem>>, vector<4x32xf32>
    %cst_7 = arith.constant dense<0.000000e+00> : vector<8x32xf32>
    %10 = tpu.matmul %8, %9, %cst_7 {dimension_numbers = #tpu.dot_dimension_numbers<[1], [0], [0], [1], [0, 0, 1, 1], [], []>} : vector<8x4xf32>, vector<4x32xf32>, vector<8x32xf32> -> vector<8x32xf32>
    %11 = arith.addf %7, %10 : vector<8x32xf32>
    %c0_8 = arith.constant 0 : index
    %c0_9 = arith.constant 0 : index
    %12 = vector.load %arg3[%c0_8, %c0_9] : memref<8x1xf32, #tpu.memory_space<vmem>>, vector<8x1xf32>
    %c0_10 = arith.constant 0 : index
    %c0_11 = arith.constant 0 : index
    %13 = vector.load %arg7[%c0_10, %c0_11] : memref<1x32xf32, #tpu.memory_space<vmem>>, vector<1x32xf32>
    %14 = vector.broadcast %12 : vector<8x1xf32> to vector<8x32xf32>
    %15 = vector.broadcast %13 : vector<1x32xf32> to vector<8x32xf32>
    %16 = arith.mulf %14, %15 : vector<8x32xf32>
    %17 = arith.addf %11, %16 : vector<8x32xf32>
    %c0_12 = arith.constant 0 : index
    %c0_13 = arith.constant 0 : index
    %18 = vector.load %arg4[%c0_12, %c0_13] : memref<8x1xf32, #tpu.memory_space<vmem>>, vector<8x1xf32>
    %c0_14 = arith.constant 0 : index
    %c0_15 = arith.constant 0 : index
    %19 = vector.load %arg8[%c0_14, %c0_15] : memref<1x32xf32, #tpu.memory_space<vmem>>, vector<1x32xf32>
    %20 = vector.broadcast %18 : vector<8x1xf32> to vector<8x32xf32>
    %21 = vector.broadcast %19 : vector<1x32xf32> to vector<8x32xf32>
    %22 = arith.mulf %20, %21 : vector<8x32xf32>
    %23 = arith.addf %17, %22 : vector<8x32xf32>
    %c0_16 = arith.constant 0 : index
    %c0_17 = arith.constant 0 : index
    %24 = vector.load %arg9[%c0_16, %c0_17] : memref<1x32xf32, #tpu.memory_space<vmem>>, vector<1x32xf32>
    %25 = vector.broadcast %24 : vector<1x32xf32> to vector<8x32xf32>
    %26 = arith.addf %23, %25 : vector<8x32xf32>
    %c0_18 = arith.constant 0 : index
    %c0_19 = arith.constant 0 : index
    %27 = vector.load %arg10[%c0_18, %c0_19] : memref<32x32xf32, #tpu.memory_space<vmem>>, vector<32x32xf32>
    %cst_20 = arith.constant dense<0.000000e+00> : vector<8x32xf32>
    %28 = tpu.matmul %26, %27, %cst_20 {dimension_numbers = #tpu.dot_dimension_numbers<[1], [0], [0], [1], [0, 0, 1, 1], [], []>} : vector<8x32xf32>, vector<32x32xf32>, vector<8x32xf32> -> vector<8x32xf32>
    %c0_21 = arith.constant 0 : index
    %c0_22 = arith.constant 0 : index
    %29 = vector.load %arg11[%c0_21, %c0_22] : memref<1x32xf32, #tpu.memory_space<vmem>>, vector<1x32xf32>
    %30 = vector.broadcast %29 : vector<1x32xf32> to vector<8x32xf32>
    %31 = arith.addf %28, %30 : vector<8x32xf32>
    %cst_23 = arith.constant 1.000000e+00 : f32
    %32 = vector.broadcast %cst_23 : f32 to vector<8x32xf32>
    %33 = arith.mulf %32, %31 : vector<8x32xf32>
    %34 = arith.negf %33 : vector<8x32xf32>
    %35 = math.exp %34 : vector<8x32xf32>
    %cst_24 = arith.constant 1.000000e+00 : f32
    %36 = vector.broadcast %cst_24 : f32 to vector<8x32xf32>
    %37 = arith.addf %36, %35 : vector<8x32xf32>
    %38 = arith.divf %36, %37 : vector<8x32xf32>
    %39 = arith.mulf %31, %38 : vector<8x32xf32>
    %c0_25 = arith.constant 0 : index
    %c0_26 = arith.constant 0 : index
    %40 = vector.load %arg12[%c0_25, %c0_26] : memref<32x32xf32, #tpu.memory_space<vmem>>, vector<32x32xf32>
    %cst_27 = arith.constant dense<0.000000e+00> : vector<8x32xf32>
    %41 = tpu.matmul %39, %40, %cst_27 {dimension_numbers = #tpu.dot_dimension_numbers<[1], [0], [0], [1], [0, 0, 1, 1], [], []>} : vector<8x32xf32>, vector<32x32xf32>, vector<8x32xf32> -> vector<8x32xf32>
    %c0_28 = arith.constant 0 : index
    %c0_29 = arith.constant 0 : index
    %42 = vector.load %arg13[%c0_28, %c0_29] : memref<1x32xf32, #tpu.memory_space<vmem>>, vector<1x32xf32>
    %43 = vector.broadcast %42 : vector<1x32xf32> to vector<8x32xf32>
    %44 = arith.addf %41, %43 : vector<8x32xf32>
    %cst_30 = arith.constant 1.000000e+00 : f32
    %45 = vector.broadcast %cst_30 : f32 to vector<8x32xf32>
    %46 = arith.mulf %45, %44 : vector<8x32xf32>
    %47 = arith.negf %46 : vector<8x32xf32>
    %48 = math.exp %47 : vector<8x32xf32>
    %cst_31 = arith.constant 1.000000e+00 : f32
    %49 = vector.broadcast %cst_31 : f32 to vector<8x32xf32>
    %50 = arith.addf %49, %48 : vector<8x32xf32>
    %51 = arith.divf %49, %50 : vector<8x32xf32>
    %52 = arith.mulf %44, %51 : vector<8x32xf32>
    %c0_32 = arith.constant 0 : index
    %c0_33 = arith.constant 0 : index
    %53 = vector.load %arg14[%c0_32, %c0_33] : memref<8x32xf32, #tpu.memory_space<vmem>>, vector<8x32xf32>
    %cst_34 = arith.constant dense<0.000000e+00> : vector<8x8xf32>
    %54 = tpu.matmul %53, %52, %cst_34 {dimension_numbers = #tpu.dot_dimension_numbers<[1], [1], [0], [0], [0, 0, 1, 0], [], []>} : vector<8x32xf32>, vector<8x32xf32>, vector<8x8xf32> -> vector<8x8xf32>
    %c0_35 = arith.constant 0 : index
    %c0_36 = arith.constant 0 : index
    %55 = vector.load %arg15[%c0_35, %c0_36] : memref<8x1xf32, #tpu.memory_space<vmem>>, vector<8x1xf32>
    %56 = vector.broadcast %55 : vector<8x1xf32> to vector<8x8xf32>
    %57 = arith.addf %54, %56 : vector<8x8xf32>
    %c0_37 = arith.constant 0 : index
    %c0_38 = arith.constant 0 : index
    %58 = vector.load %arg16[%c0_37, %c0_38] : memref<8x8xf32, #tpu.memory_space<vmem>>, vector<8x8xf32>
    tpu.vector_store %arg16[%c0_37, %c0_38], %57 {strides = array<i32>} : memref<8x8xf32, #tpu.memory_space<vmem>>, vector<8x8xf32>,
    return
  }
  func.func @transform_0(%arg0: i32) -> (i32, i32) {
    %c0_i32 = arith.constant 0 : i32
    %c0_i32_0 = arith.constant 0 : i32
    return %arg0, %c0_i32 : i32, i32
  }
  func.func @transform_1(%arg0: i32) -> (i32, i32) {
    %c0_i32 = arith.constant 0 : i32
    %c0_i32_0 = arith.constant 0 : i32
    return %arg0, %c0_i32 : i32, i32
  }
  func.func @transform_2(%arg0: i32) -> (i32, i32) {
    %c0_i32 = arith.constant 0 : i32
    %c0_i32_0 = arith.constant 0 : i32
    return %arg0, %c0_i32 : i32, i32
  }
  func.func @transform_3(%arg0: i32) -> (i32, i32) {
    %c0_i32 = arith.constant 0 : i32
    %c0_i32_0 = arith.constant 0 : i32
    return %arg0, %c0_i32 : i32, i32
  }
  func.func @transform_4(%arg0: i32) -> (i32, i32) {
    %c0_i32 = arith.constant 0 : i32
    %c0_i32_0 = arith.constant 0 : i32
    %c0_i32_1 = arith.constant 0 : i32
    return %c0_i32, %c0_i32_0 : i32, i32
  }
  func.func @transform_5(%arg0: i32) -> (i32, i32) {
    %c0_i32 = arith.constant 0 : i32
    %c0_i32_0 = arith.constant 0 : i32
    %c0_i32_1 = arith.constant 0 : i32
    return %c0_i32, %c0_i32_0 : i32, i32
  }
  func.func @transform_6(%arg0: i32) -> (i32, i32) {
    %c0_i32 = arith.constant 0 : i32
    %c0_i32_0 = arith.constant 0 : i32
    %c0_i32_1 = arith.constant 0 : i32
    return %c0_i32, %c0_i32_0 : i32, i32
  }
  func.func @transform_7(%arg0: i32) -> (i32, i32) {
    %c0_i32 = arith.constant 0 : i32
    %c0_i32_0 = arith.constant 0 : i32
    %c0_i32_1 = arith.constant 0 : i32
    return %c0_i32, %c0_i32_0 : i32, i32
  }
  func.func @transform_8(%arg0: i32) -> (i32, i32) {
    %c0_i32 = arith.constant 0 : i32
    %c0_i32_0 = arith.constant 0 : i32
    %c0_i32_1 = arith.constant 0 : i32
    return %c0_i32, %c0_i32_0 : i32, i32
  }
  func.func @transform_9(%arg0: i32) -> (i32, i32) {
    %c0_i32 = arith.constant 0 : i32
    %c0_i32_0 = arith.constant 0 : i32
    %c0_i32_1 = arith.constant 0 : i32
    return %c0_i32, %c0_i32_0 : i32, i32
  }
  func.func @transform_10(%arg0: i32) -> (i32, i32) {
    %c0_i32 = arith.constant 0 : i32
    %c0_i32_0 = arith.constant 0 : i32
    %c0_i32_1 = arith.constant 0 : i32
    return %c0_i32, %c0_i32_0 : i32, i32
  }
  func.func @transform_11(%arg0: i32) -> (i32, i32) {
    %c0_i32 = arith.constant 0 : i32
    %c0_i32_0 = arith.constant 0 : i32
    %c0_i32_1 = arith.constant 0 : i32
    return %c0_i32, %c0_i32_0 : i32, i32
  }
  func.func @transform_12(%arg0: i32) -> (i32, i32) {
    %c0_i32 = arith.constant 0 : i32
    %c0_i32_0 = arith.constant 0 : i32
    %c0_i32_1 = arith.constant 0 : i32
    return %c0_i32, %c0_i32_0 : i32, i32
  }
  func.func @transform_13(%arg0: i32) -> (i32, i32) {
    %c0_i32 = arith.constant 0 : i32
    %c0_i32_0 = arith.constant 0 : i32
    %c0_i32_1 = arith.constant 0 : i32
    return %c0_i32, %c0_i32_0 : i32, i32
  }
  func.func @transform_14(%arg0: i32) -> (i32, i32) {
    %c0_i32 = arith.constant 0 : i32
    %c0_i32_0 = arith.constant 0 : i32
    %c0_i32_1 = arith.constant 0 : i32
    return %c0_i32, %c0_i32_0 : i32, i32
  }
  func.func @transform_15(%arg0: i32) -> (i32, i32) {
    %c0_i32 = arith.constant 0 : i32
    %c0_i32_0 = arith.constant 0 : i32
    return %c0_i32, %arg0 : i32, i32
  }
}

</mosaic_0001>

<llo_original>
// kernel: behavior_forward.1
$region0: #{behavior_forward.1}
  #allocation0 [shape = 'u32[]', space=smem, size = 0x4, offset = 0x4, fixed_abs, tag = 'smem constant byte address 0x4 - core index']
  #allocation1 [shape = 'u32[144,128]{1,0:T(1,128)}', space=vmem, size = 0x12000, scoped, tag = 'internal scratch']
  %s0 = inlined_call_operand.vmem [shape: s32[8,1], index: 0, kind: input, shape index: {}]
  %s1 = inlined_call_operand.vmem [shape: f32[8,4], index: 1, kind: input, shape index: {}]
  %s2 = inlined_call_operand.vmem [shape: f32[8,1], index: 2, kind: input, shape index: {}]
  %s3 = inlined_call_operand.vmem [shape: f32[8,1], index: 3, kind: input, shape index: {}]
  %s4 = inlined_call_operand.vmem [shape: f32[8,32], index: 4, kind: input, shape index: {}]
  %s5 = inlined_call_operand.vmem [shape: f32[4,32], index: 5, kind: input, shape index: {}]
  %s6 = inlined_call_operand.vmem [shape: f32[1,32], index: 6, kind: input, shape index: {}]
  %s7 = inlined_call_operand.vmem [shape: f32[1,32], index: 7, kind: input, shape index: {}]
  %s8 = inlined_call_operand.vmem [shape: f32[1,32], index: 8, kind: input, shape index: {}]
  %s9 = inlined_call_operand.vmem [shape: f32[32,32], index: 9, kind: input, shape index: {}]
  %s10 = inlined_call_operand.vmem [shape: f32[1,32], index: 10, kind: input, shape index: {}]
  %s11 = inlined_call_operand.vmem [shape: f32[32,32], index: 11, kind: input, shape index: {}]
  %s12 = inlined_call_operand.vmem [shape: f32[1,32], index: 12, kind: input, shape index: {}]
  %s13 = inlined_call_operand.vmem [shape: f32[8,32], index: 13, kind: input, shape index: {}]
  %s14 = inlined_call_operand.vmem [shape: f32[8,1], index: 14, kind: input, shape index: {}]
  %s15 = inlined_call_operand.vmem [shape: f32[8,8], index: 15, kind: output, shape index: {}]
  %s16 = sld [smem:[#allocation0]]
  $region70: #{behavior_forward.1} parent=0
    _
  %s18 = ssub.s32 1, %s16
  %s19 = scalar_select 0, %s18, %s16
  // Predicated region
  $region2: #{behavior_forward.1} parent=0 // pred_check
    _
  $region3: #{behavior_forward.1} parent=0 // pred_check_branch
    %21 = sbr.rel (0) target = $region5
  $region4: #{behavior_forward.1} parent=0 // pred_region
    _
  $region5: #{behavior_forward.1} parent=0 // pred_fallthru
    _
  // Predicated region
  $region6: #{behavior_forward.1} parent=0 // pred_check
    _
  $region7: #{behavior_forward.1} parent=0 // pred_check_branch
    %23 = sbr.rel (0) target = $region9
  $region8: #{behavior_forward.1} parent=0 // pred_region
    _
  $region9: #{behavior_forward.1} parent=0 // pred_fallthru
    _
  // Predicated region
  $region10: #{behavior_forward.1} parent=0 // pred_check
    _
  $region11: #{behavior_forward.1} parent=0 // pred_check_branch
    %25 = sbr.rel (0) target = $region13
  $region12: #{behavior_forward.1} parent=0 // pred_region
    _
  $region13: #{behavior_forward.1} parent=0 // pred_fallthru
    _
  // Predicated region
  $region14: #{behavior_forward.1} parent=0 // pred_check
    _
  $region15: #{behavior_forward.1} parent=0 // pred_check_branch
    %27 = sbr.rel (0) target = $region17
  $region16: #{behavior_forward.1} parent=0 // pred_region
    _
  $region17: #{behavior_forward.1} parent=0 // pred_fallthru
    _
  // Predicated region
  $region18: #{behavior_forward.1} parent=0 // pred_check
    _
  $region19: #{behavior_forward.1} parent=0 // pred_check_branch
    %29 = sbr.rel (0) target = $region21
  $region20: #{behavior_forward.1} parent=0 // pred_region
    _
  $region21: #{behavior_forward.1} parent=0 // pred_fallthru
    _
  // Predicated region
  $region22: #{behavior_forward.1} parent=0 // pred_check
    _
  $region23: #{behavior_forward.1} parent=0 // pred_check_branch
    %31 = sbr.rel (0) target = $region25
  $region24: #{behavior_forward.1} parent=0 // pred_region
    _
  $region25: #{behavior_forward.1} parent=0 // pred_fallthru
    _
  // Predicated region
  $region26: #{behavior_forward.1} parent=0 // pred_check
    _
  $region27: #{behavior_forward.1} parent=0 // pred_check_branch
    %33 = sbr.rel (0) target = $region29
  $region28: #{behavior_forward.1} parent=0 // pred_region
    _
  $region29: #{behavior_forward.1} parent=0 // pred_fallthru
    _
  // Predicated region
  $region30: #{behavior_forward.1} parent=0 // pred_check
    _
  $region31: #{behavior_forward.1} parent=0 // pred_check_branch
    %35 = sbr.rel (0) target = $region33
  $region32: #{behavior_forward.1} parent=0 // pred_region
    _
  $region33: #{behavior_forward.1} parent=0 // pred_fallthru
    _
  // Predicated region
  $region34: #{behavior_forward.1} parent=0 // pred_check
    _
  $region35: #{behavior_forward.1} parent=0 // pred_check_branch
    %37 = sbr.rel (0) target = $region37
  $region36: #{behavior_forward.1} parent=0 // pred_region
    _
  $region37: #{behavior_forward.1} parent=0 // pred_fallthru
    _
  // Predicated region
  $region38: #{behavior_forward.1} parent=0 // pred_check
    _
  $region39: #{behavior_forward.1} parent=0 // pred_check_branch
    %39 = sbr.rel (0) target = $region41
  $region40: #{behavior_forward.1} parent=0 // pred_region
    _
  $region41: #{behavior_forward.1} parent=0 // pred_fallthru
    _
  // Predicated region
  $region42: #{behavior_forward.1} parent=0 // pred_check
    _
  $region43: #{behavior_forward.1} parent=0 // pred_check_branch
    %41 = sbr.rel (0) target = $region45
  $region44: #{behavior_forward.1} parent=0 // pred_region
    _
  $region45: #{behavior_forward.1} parent=0 // pred_fallthru
    _
  // Predicated region
  $region46: #{behavior_forward.1} parent=0 // pred_check
    _
  $region47: #{behavior_forward.1} parent=0 // pred_check_branch
    %43 = sbr.rel (0) target = $region49
  $region48: #{behavior_forward.1} parent=0 // pred_region
    _
  $region49: #{behavior_forward.1} parent=0 // pred_fallthru
    _
  // Predicated region
  $region50: #{behavior_forward.1} parent=0 // pred_check
    _
  $region51: #{behavior_forward.1} parent=0 // pred_check_branch
    %45 = sbr.rel (0) target = $region53
  $region52: #{behavior_forward.1} parent=0 // pred_region
    _
  $region53: #{behavior_forward.1} parent=0 // pred_fallthru
    _
  // Predicated region
  $region54: #{behavior_forward.1} parent=0 // pred_check
    _
  $region55: #{behavior_forward.1} parent=0 // pred_check_branch
    %47 = sbr.rel (0) target = $region57
  $region56: #{behavior_forward.1} parent=0 // pred_region
    _
  $region57: #{behavior_forward.1} parent=0 // pred_fallthru
    _
  // Predicated region
  $region58: #{behavior_forward.1} parent=0 // pred_check
    _
  $region59: #{behavior_forward.1} parent=0 // pred_check_branch
    %49 = sbr.rel (0) target = $region61
  $region60: #{behavior_forward.1} parent=0 // pred_region
    _
  $region61: #{behavior_forward.1} parent=0 // pred_fallthru
    _
  %v50 = vld [vmem:[%s0] sm:$0xff]
  %v51 = vlaneseq
  %v52 = vand.u32 %v51, 127
  %53 = vset.pattern.permute.xlu0 0
  %54 = vperm.xlu0 %53, %v50
  %v55 = vpop.permute.xlu0 %54
  %vm56 = vcmp.eq.s32.totalorder %v52, %v55
  %v57 = vsel %vm56, 1, 0
  %v58 = vcvt.s32.f32 %v57
  %v59 = vld [vmem:[%s4] sm:$0xff]
  %v60 = vld [vmem:[%s1] sm:$0xff]
  %v61 = vld [vmem:[%s5] sm:$0xf]
  %vm62 = vcmask 31744
  %v64 = vsel %vm62, %v60, 0
  %vm66 = vcmask 1043456
  %v68 = vsel %vm66, %v61, 0
  %70 = vmatprep.subr.mxu0 0.0
  %71 = vmatpush1.msra.mxu0 %v68
  %72 = vmatprep.subr.mxu0 0.0
  %73 = vmatpush1.msra.mxu0 0.0
  %74 = vmatprep.subr.mxu0 0.0
  %75 = vmatpush1.msra.mxu0 0.0
  %76 = vmatprep.subr.mxu0 0.0
  %77 = vmatpush1.msra.mxu0 0.0
  %78 = vmatprep.subr.mxu0 0.0
  %79 = vmatpush1.msra.mxu0 0.0
  %80 = vmatprep.subr.mxu0 0.0
  %81 = vmatpush1.msra.mxu0 0.0
  %82 = vmatprep.subr.mxu0 0.0
  %83 = vmatpush1.msra.mxu0 0.0
  %84 = vmatprep.subr.mxu0 0.0
  %85 = vmatpush1.msra.mxu0 0.0
  %86 = vmatprep.subr.mxu0 0.0
  %87 = vmatpush1.msra.mxu0 0.0
  %88 = vmatprep.subr.mxu0 0.0
  %89 = vmatpush1.msra.mxu0 0.0
  %90 = vmatprep.subr.mxu0 0.0
  %91 = vmatpush1.msra.mxu0 0.0
  %92 = vmatprep.subr.mxu0 0.0
  %93 = vmatpush1.msra.mxu0 0.0
  %94 = vmatprep.subr.mxu0 0.0
  %95 = vmatpush1.msra.mxu0 0.0
  %96 = vmatprep.subr.mxu0 0.0
  %97 = vmatpush1.msra.mxu0 0.0
  %98 = vmatprep.subr.mxu0 0.0
  %99 = vmatpush1.msra.mxu0 0.0
  %100 = vmatprep.subr.mxu0 0.0
  %101 = vmatpush1.msra.mxu0 0.0
  %102 = vmatprep.subr.mxu0 0.0
  %103 = vmatpush1.msra.mxu0 0.0
  %104 = vmatprep.subr.mxu0 0.0
  %105 = vmatpush1.msra.mxu0 0.0
  %106 = vmatprep.subr.mxu0 0.0
  %107 = vmatpush1.msra.mxu0 0.0
  %108 = vmatprep.subr.mxu0 0.0
  %109 = vmatpush1.msra.mxu0 0.0
  %110 = vmatprep.subr.mxu0 0.0
  %111 = vmatpush1.msra.mxu0 0.0
  %112 = vmatprep.subr.mxu0 0.0
  %113 = vmatpush1.msra.mxu0 0.0
  %114 = vmatprep.subr.mxu0 0.0
  %115 = vmatpush1.msra.mxu0 0.0
  %116 = vmatprep.subr.mxu0 0.0
  %117 = vmatpush1.msra.mxu0 0.0
  %118 = vmatprep.subr.mxu0 0.0
  %119 = vmatpush1.msra.mxu0 0.0
  %120 = vmatprep.subr.mxu0 0.0
  %121 = vmatpush1.msra.mxu0 0.0
  %122 = vmatprep.subr.mxu0 0.0
  %123 = vmatpush1.msra.mxu0 0.0
  %124 = vmatprep.subr.mxu0 0.0
  %125 = vmatpush1.msra.mxu0 0.0
  %126 = vmatprep.subr.mxu0 0.0
  %127 = vmatpush1.msra.mxu0 0.0
  %128 = vmatprep.subr.mxu0 0.0
  %129 = vmatpush1.msra.mxu0 0.0
  %130 = vmatprep.subr.mxu0 0.0
  %131 = vmatpush1.msra.mxu0 0.0
  %132 = vmatprep.subr.mxu0 0.0
  %133 = vmatpush1.msra.mxu0 0.0
  %134 = vmatprep.mubr.f32.mxu0 0.0
  %135 = vmatmul.mubr.f32.gmra.mrb[0].mxu0 %v64
  %v136 = vpop.f32.mrb[0].mxu0
  %v137 = vadd.f32 0.0, %v136
  %v138 = vpop.f32.mrb[0].mxu0
  %139 = vdwg.mxu0
  %vm140 = vcmask 64512
  %v142 = vsel %vm140, %v58, 0
  %144 = vmatprep.subr.mxu0 0.0
  %145 = vmatpush1.msra.mxu0 %v59
  %146 = vmatprep.subr.mxu0 0.0
  %147 = vmatpush1.msra.mxu0 0.0
  %148 = vmatprep.subr.mxu0 0.0
  %149 = vmatpush1.msra.mxu0 0.0
  %150 = vmatprep.subr.mxu0 0.0
  %151 = vmatpush1.msra.mxu0 0.0
  %152 = vmatprep.subr.mxu0 0.0
  %153 = vmatpush1.msra.mxu0 0.0
  %154 = vmatprep.subr.mxu0 0.0
  %155 = vmatpush1.msra.mxu0 0.0
  %156 = vmatprep.subr.mxu0 0.0
  %157 = vmatpush1.msra.mxu0 0.0
  %158 = vmatprep.subr.mxu0 0.0
  %159 = vmatpush1.msra.mxu0 0.0
  %160 = vmatprep.subr.mxu0 0.0
  %161 = vmatpush1.msra.mxu0 0.0
  %162 = vmatprep.subr.mxu0 0.0
  %163 = vmatpush1.msra.mxu0 0.0
  %164 = vmatprep.subr.mxu0 0.0
  %165 = vmatpush1.msra.mxu0 0.0
  %166 = vmatprep.subr.mxu0 0.0
  %167 = vmatpush1.msra.mxu0 0.0
  %168 = vmatprep.subr.mxu0 0.0
  %169 = vmatpush1.msra.mxu0 0.0
  %170 = vmatprep.subr.mxu0 0.0
  %171 = vmatpush1.msra.mxu0 0.0
  %172 = vmatprep.subr.mxu0 0.0
  %173 = vmatpush1.msra.mxu0 0.0
  %174 = vmatprep.subr.mxu0 0.0
  %175 = vmatpush1.msra.mxu0 0.0
  %176 = vmatprep.subr.mxu0 0.0
  %177 = vmatpush1.msra.mxu0 0.0
  %178 = vmatprep.subr.mxu0 0.0
  %179 = vmatpush1.msra.mxu0 0.0
  %180 = vmatprep.subr.mxu0 0.0
  %181 = vmatpush1.msra.mxu0 0.0
  %182 = vmatprep.subr.mxu0 0.0
  %183 = vmatpush1.msra.mxu0 0.0
  %184 = vmatprep.subr.mxu0 0.0
  %185 = vmatpush1.msra.mxu0 0.0
  %186 = vmatprep.subr.mxu0 0.0
  %187 = vmatpush1.msra.mxu0 0.0
  %188 = vmatprep.subr.mxu0 0.0
  %189 = vmatpush1.msra.mxu0 0.0
  %190 = vmatprep.subr.mxu0 0.0
  %191 = vmatpush1.msra.mxu0 0.0
  %192 = vmatprep.subr.mxu0 0.0
  %193 = vmatpush1.msra.mxu0 0.0
  %194 = vmatprep.subr.mxu0 0.0
  %195 = vmatpush1.msra.mxu0 0.0
  %196 = vmatprep.subr.mxu0 0.0
  %197 = vmatpush1.msra.mxu0 0.0
  %198 = vmatprep.subr.mxu0 0.0
  %199 = vmatpush1.msra.mxu0 0.0
  %200 = vmatprep.subr.mxu0 0.0
  %201 = vmatpush1.msra.mxu0 0.0
  %202 = vmatprep.subr.mxu0 0.0
  %203 = vmatpush1.msra.mxu0 0.0
  %204 = vmatprep.subr.mxu0 0.0
  %205 = vmatpush1.msra.mxu0 0.0
  %206 = vmatprep.subr.mxu0 0.0
  %207 = vmatpush1.msra.mxu0 0.0
  %208 = vmatprep.mubr.f32.mxu0 0.0
  %209 = vmatmul.mubr.f32.gmra.mrb[0].mxu0 %v142
  %v210 = vpop.f32.mrb[0].mxu0
  %v211 = vadd.f32 %v137, %v210
  %v212 = vpop.f32.mrb[0].mxu0
  %213 = vdwg.mxu0
  %v214 = vld [vmem:[%s2] sm:$0xff]
  %v215 = vld [vmem:[%s6] sm:$0x1]
  %217 = vset.pattern.permute.xlu0 0
  %218 = vperm.xlu0 %217, %v214
  %v219 = vpop.permute.xlu0 %218
  %v222 = vlaneseq
  %v223 = vshrl.u32 %v222, 7
  %v224 = vsub.s32 0, %v223
  %v225 = vrot.slane %v215, %v224
  %v227 = vmul.f32 %v219, %v225
  %v228 = vadd.f32 %v211, %v227
  %v229 = vld [vmem:[%s3] sm:$0xff]
  %v230 = vld [vmem:[%s7] sm:$0x1]
  %232 = vset.pattern.permute.xlu0 0
  %233 = vperm.xlu0 %232, %v229
  %v234 = vpop.permute.xlu0 %233
  %v237 = vlaneseq
  %v238 = vshrl.u32 %v237, 7
  %v239 = vsub.s32 0, %v238
  %v240 = vrot.slane %v230, %v239
  %v242 = vmul.f32 %v234, %v240
  %v243 = vadd.f32 %v228, %v242
  %v244 = vld [vmem:[%s8] sm:$0x1]
  %v246 = vlaneseq
  %v247 = vshrl.u32 %v246, 7
  %v248 = vsub.s32 0, %v247
  %v249 = vrot.slane %v244, %v248
  %v251 = vadd.f32 %v243, %v249
  %v252 = vld [vmem:[%s9] sm:$0xff]
  %v253 = vld [vmem:[%s9 + $0x8] sm:$0xff]
  %v254 = vld [vmem:[%s9 + $0x10] sm:$0xff]
  %v255 = vld [vmem:[%s9 + $0x18] sm:$0xff]
  %v256 = vld [vmem:[%s10] sm:$0x1]
  %v258 = vlaneseq
  %v259 = vshrl.u32 %v258, 7
  %v260 = vsub.s32 0, %v259
  %v261 = vrot.slane %v256, %v260
  %vm263 = vcmask 261120
  %v265 = vsel %vm263, %v251, 0
  %267 = vmatprep.subr.mxu0 0.0
  %268 = vmatpush1.msra.mxu0 %v252
  %269 = vmatprep.subr.mxu0 0.0
  %270 = vmatpush1.msra.mxu0 %v253
  %271 = vmatprep.subr.mxu0 0.0
  %272 = vmatpush1.msra.mxu0 %v254
  %273 = vmatprep.subr.mxu0 0.0
  %274 = vmatpush1.msra.mxu0 %v255
  %275 = vmatprep.subr.mxu0 0.0
  %276 = vmatpush1.msra.mxu0 0.0
  %277 = vmatprep.subr.mxu0 0.0
  %278 = vmatpush1.msra.mxu0 0.0
  %279 = vmatprep.subr.mxu0 0.0
  %280 = vmatpush1.msra.mxu0 0.0
  %281 = vmatprep.subr.mxu0 0.0
  %282 = vmatpush1.msra.mxu0 0.0
  %283 = vmatprep.subr.mxu0 0.0
  %284 = vmatpush1.msra.mxu0 0.0
  %285 = vmatprep.subr.mxu0 0.0
  %286 = vmatpush1.msra.mxu0 0.0
  %287 = vmatprep.subr.mxu0 0.0
  %288 = vmatpush1.msra.mxu0 0.0
  %289 = vmatprep.subr.mxu0 0.0
  %290 = vmatpush1.msra.mxu0 0.0
  %291 = vmatprep.subr.mxu0 0.0
  %292 = vmatpush1.msra.mxu0 0.0
  %293 = vmatprep.subr.mxu0 0.0
  %294 = vmatpush1.msra.mxu0 0.0
  %295 = vmatprep.subr.mxu0 0.0
  %296 = vmatpush1.msra.mxu0 0.0
  %297 = vmatprep.subr.mxu0 0.0
  %298 = vmatpush1.msra.mxu0 0.0
  %299 = vmatprep.subr.mxu0 0.0
  %300 = vmatpush1.msra.mxu0 0.0
  %301 = vmatprep.subr.mxu0 0.0
  %302 = vmatpush1.msra.mxu0 0.0
  %303 = vmatprep.subr.mxu0 0.0
  %304 = vmatpush1.msra.mxu0 0.0
  %305 = vmatprep.subr.mxu0 0.0
  %306 = vmatpush1.msra.mxu0 0.0
  %307 = vmatprep.subr.mxu0 0.0
  %308 = vmatpush1.msra.mxu0 0.0
  %309 = vmatprep.subr.mxu0 0.0
  %310 = vmatpush1.msra.mxu0 0.0
  %311 = vmatprep.subr.mxu0 0.0
  %312 = vmatpush1.msra.mxu0 0.0
  %313 = vmatprep.subr.mxu0 0.0
  %314 = vmatpush1.msra.mxu0 0.0
  %315 = vmatprep.subr.mxu0 0.0
  %316 = vmatpush1.msra.mxu0 0.0
  %317 = vmatprep.subr.mxu0 0.0
  %318 = vmatpush1.msra.mxu0 0.0
  %319 = vmatprep.subr.mxu0 0.0
  %320 = vmatpush1.msra.mxu0 0.0
  %321 = vmatprep.subr.mxu0 0.0
  %322 = vmatpush1.msra.mxu0 0.0
  %323 = vmatprep.subr.mxu0 0.0
  %324 = vmatpush1.msra.mxu0 0.0
  %325 = vmatprep.subr.mxu0 0.0
  %326 = vmatpush1.msra.mxu0 0.0
  %327 = vmatprep.subr.mxu0 0.0
  %328 = vmatpush1.msra.mxu0 0.0
  %329 = vmatprep.subr.mxu0 0.0
  %330 = vmatpush1.msra.mxu0 0.0
  %331 = vmatprep.mubr.f32.mxu0 0.0
  %332 = vmatmul.mubr.f32.gmra.mrb[0].mxu0 %v265
  %v333 = vpop.f32.mrb[0].mxu0
  %v334 = vadd.f32 %v261, %v333
  %v335 = vpop.f32.mrb[0].mxu0
  %336 = vdwg.mxu0
  %v337 = vxor.u32 %v334, 2147483648
  %v338 = vmul.f32 %v337, 1.442695
  %v339 = vpow.pop %v338
  %v340 = vadd.f32 %v339, 1.0
  %v341 = vrcp.pop %v340
  %v342 = vmul.f32 1.0, %v341
  %v343 = vmul.f32 %v334, %v342
  %v344 = vld [vmem:[%s11] sm:$0xff]
  %v345 = vld [vmem:[%s11 + $0x8] sm:$0xff]
  %v346 = vld [vmem:[%s11 + $0x10] sm:$0xff]
  %v347 = vld [vmem:[%s11 + $0x18] sm:$0xff]
  %v348 = vld [vmem:[%s12] sm:$0x1]
  %v350 = vlaneseq
  %v351 = vshrl.u32 %v350, 7
  %v352 = vsub.s32 0, %v351
  %v353 = vrot.slane %v348, %v352
  %v356 = vsel %vm263, %v343, 0
  %358 = vmatprep.subr.mxu0 0.0
  %359 = vmatpush1.msra.mxu0 %v344
  %360 = vmatprep.subr.mxu0 0.0
  %361 = vmatpush1.msra.mxu0 %v345
  %362 = vmatprep.subr.mxu0 0.0
  %363 = vmatpush1.msra.mxu0 %v346
  %364 = vmatprep.subr.mxu0 0.0
  %365 = vmatpush1.msra.mxu0 %v347
  %366 = vmatprep.subr.mxu0 0.0
  %367 = vmatpush1.msra.mxu0 0.0
  %368 = vmatprep.subr.mxu0 0.0
  %369 = vmatpush1.msra.mxu0 0.0
  %370 = vmatprep.subr.mxu0 0.0
  %371 = vmatpush1.msra.mxu0 0.0
  %372 = vmatprep.subr.mxu0 0.0
  %373 = vmatpush1.msra.mxu0 0.0
  %374 = vmatprep.subr.mxu0 0.0
  %375 = vmatpush1.msra.mxu0 0.0
  %376 = vmatprep.subr.mxu0 0.0
  %377 = vmatpush1.msra.mxu0 0.0
  %378 = vmatprep.subr.mxu0 0.0
  %379 = vmatpush1.msra.mxu0 0.0
  %380 = vmatprep.subr.mxu0 0.0
  %381 = vmatpush1.msra.mxu0 0.0
  %382 = vmatprep.subr.mxu0 0.0
  %383 = vmatpush1.msra.mxu0 0.0
  %384 = vmatprep.subr.mxu0 0.0
  %385 = vmatpush1.msra.mxu0 0.0
  %386 = vmatprep.subr.mxu0 0.0
  %387 = vmatpush1.msra.mxu0 0.0
  %388 = vmatprep.subr.mxu0 0.0
  %389 = vmatpush1.msra.mxu0 0.0
  %390 = vmatprep.subr.mxu0 0.0
  %391 = vmatpush1.msra.mxu0 0.0
  %392 = vmatprep.subr.mxu0 0.0
  %393 = vmatpush1.msra.mxu0 0.0
  %394 = vmatprep.subr.mxu0 0.0
  %395 = vmatpush1.msra.mxu0 0.0
  %396 = vmatprep.subr.mxu0 0.0
  %397 = vmatpush1.msra.mxu0 0.0
  %398 = vmatprep.subr.mxu0 0.0
  %399 = vmatpush1.msra.mxu0 0.0
  %400 = vmatprep.subr.mxu0 0.0
  %401 = vmatpush1.msra.mxu0 0.0
  %402 = vmatprep.subr.mxu0 0.0
  %403 = vmatpush1.msra.mxu0 0.0
  %404 = vmatprep.subr.mxu0 0.0
  %405 = vmatpush1.msra.mxu0 0.0
  %406 = vmatprep.subr.mxu0 0.0
  %407 = vmatpush1.msra.mxu0 0.0
  %408 = vmatprep.subr.mxu0 0.0
  %409 = vmatpush1.msra.mxu0 0.0
  %410 = vmatprep.subr.mxu0 0.0
  %411 = vmatpush1.msra.mxu0 0.0
  %412 = vmatprep.subr.mxu0 0.0
  %413 = vmatpush1.msra.mxu0 0.0
  %414 = vmatprep.subr.mxu0 0.0
  %415 = vmatpush1.msra.mxu0 0.0
  %416 = vmatprep.subr.mxu0 0.0
  %417 = vmatpush1.msra.mxu0 0.0
  %418 = vmatprep.subr.mxu0 0.0
  %419 = vmatpush1.msra.mxu0 0.0
  %420 = vmatprep.subr.mxu0 0.0
  %421 = vmatpush1.msra.mxu0 0.0
  %422 = vmatprep.mubr.f32.mxu0 0.0
  %423 = vmatmul.mubr.f32.gmra.mrb[0].mxu0 %v356
  %v424 = vpop.f32.mrb[0].mxu0
  %v425 = vadd.f32 %v353, %v424
  %v426 = vpop.f32.mrb[0].mxu0
  %427 = vdwg.mxu0
  %v428 = vxor.u32 %v425, 2147483648
  %v429 = vmul.f32 %v428, 1.442695
  %v430 = vpow.pop %v429
  %v431 = vadd.f32 %v430, 1.0
  %v432 = vrcp.pop %v431
  %v433 = vmul.f32 1.0, %v432
  %v434 = vmul.f32 %v425, %v433
  %v435 = vld [vmem:[%s13] sm:$0xff]
  %v436 = vld [vmem:[%s14] sm:$0xff]
  %438 = vset.pattern.permute.xlu0 0
  %439 = vperm.xlu0 %438, %v436
  %v440 = vpop.permute.xlu0 %439
  %v443 = vsel %vm263, %v435, 0
  %v446 = vsel %vm263, %v434, 0
  %448 = vmatprep.subr.mxu0 0.0
  %449 = vmatpush1.xpose.msra.mxu0 %v446
  %450 = vmatprep.subr.mxu0 0.0
  %451 = vmatpush1.xpose.msra.mxu0 0.0
  %452 = vmatprep.subr.mxu0 0.0
  %453 = vmatpush1.xpose.msra.mxu0 0.0
  %454 = vmatprep.subr.mxu0 0.0
  %455 = vmatpush1.xpose.msra.mxu0 0.0
  %456 = vmatprep.subr.mxu0 0.0
  %457 = vmatpush1.xpose.msra.mxu0 0.0
  %458 = vmatprep.subr.mxu0 0.0
  %459 = vmatpush1.xpose.msra.mxu0 0.0
  %460 = vmatprep.subr.mxu0 0.0
  %461 = vmatpush1.xpose.msra.mxu0 0.0
  %462 = vmatprep.subr.mxu0 0.0
  %463 = vmatpush1.xpose.msra.mxu0 0.0
  %464 = vmatprep.subr.mxu0 0.0
  %465 = vmatpush1.xpose.msra.mxu0 0.0
  %466 = vmatprep.subr.mxu0 0.0
  %467 = vmatpush1.xpose.msra.mxu0 0.0
  %468 = vmatprep.subr.mxu0 0.0
  %469 = vmatpush1.xpose.msra.mxu0 0.0
  %470 = vmatprep.subr.mxu0 0.0
  %471 = vmatpush1.xpose.msra.mxu0 0.0
  %472 = vmatprep.subr.mxu0 0.0
  %473 = vmatpush1.xpose.msra.mxu0 0.0
  %474 = vmatprep.subr.mxu0 0.0
  %475 = vmatpush1.xpose.msra.mxu0 0.0
  %476 = vmatprep.subr.mxu0 0.0
  %477 = vmatpush1.xpose.msra.mxu0 0.0
  %478 = vmatprep.subr.mxu0 0.0
  %479 = vmatpush1.xpose.msra.mxu0 0.0
  %480 = vmatprep.subr.mxu0 0.0
  %481 = vmatpush1.xpose.msra.mxu0 0.0
  %482 = vmatprep.subr.mxu0 0.0
  %483 = vmatpush1.xpose.msra.mxu0 0.0
  %484 = vmatprep.subr.mxu0 0.0
  %485 = vmatpush1.xpose.msra.mxu0 0.0
  %486 = vmatprep.subr.mxu0 0.0
  %487 = vmatpush1.xpose.msra.mxu0 0.0
  %488 = vmatprep.subr.mxu0 0.0
  %489 = vmatpush1.xpose.msra.mxu0 0.0
  %490 = vmatprep.subr.mxu0 0.0
  %491 = vmatpush1.xpose.msra.mxu0 0.0
  %492 = vmatprep.subr.mxu0 0.0
  %493 = vmatpush1.xpose.msra.mxu0 0.0
  %494 = vmatprep.subr.mxu0 0.0
  %495 = vmatpush1.xpose.msra.mxu0 0.0
  %496 = vmatprep.subr.mxu0 0.0
  %497 = vmatpush1.xpose.msra.mxu0 0.0
  %498 = vmatprep.subr.mxu0 0.0
  %499 = vmatpush1.xpose.msra.mxu0 0.0
  %500 = vmatprep.subr.mxu0 0.0
  %501 = vmatpush1.xpose.msra.mxu0 0.0
  %502 = vmatprep.subr.mxu0 0.0
  %503 = vmatpush1.xpose.msra.mxu0 0.0
  %504 = vmatprep.subr.mxu0 0.0
  %505 = vmatpush1.xpose.msra.mxu0 0.0
  %506 = vmatprep.subr.mxu0 0.0
  %507 = vmatpush1.xpose.msra.mxu0 0.0
  %508 = vmatprep.subr.mxu0 0.0
  %509 = vmatpush1.xpose.msra.mxu0 0.0
  %510 = vmatprep.subr.mxu0 0.0
  %511 = vmatpush1.xpose.msra.mxu0 0.0
  %512 = vmatprep.mubr.f32.mxu0 0.0
  %513 = vmatmul.mubr.f32.gmra.mrb[0].mxu0 %v443
  %v514 = vpop.f32.mrb[0].mxu0
  %v515 = vadd.f32 %v440, %v514
  %v516 = vpop.f32.mrb[0].mxu0
  %517 = vdwg.mxu0
  %518 = vst.msk [vmem:[%s15] sm:$0xff] %vm140, %v515
  // Predicated region
  $region62: #{behavior_forward.1} parent=0 // pred_check
    _
  $region63: #{behavior_forward.1} parent=0 // pred_check_branch
    %520 = sbr.rel (0) target = $region65
  $region64: #{behavior_forward.1} parent=0 // pred_region
    _
  $region65: #{behavior_forward.1} parent=0 // pred_fallthru
    _
  // Predicated region
  $region66: #{behavior_forward.1} parent=0 // pred_check
    _
  $region67: #{behavior_forward.1} parent=0 // pred_check_branch
    %522 = sbr.rel (0) target = $region69
  $region68: #{behavior_forward.1} parent=0 // pred_region
    _
  $region69: #{behavior_forward.1} parent=0 // pred_fallthru
    _

</llo_original>
